<compile_context>
chip_gen: v5e
topology: v5e:2x2
jax: 0.10.0
libtpu: 0.0.40
codegen_flags: <defaults>
</compile_context>

<pallas_src>
import jax
import jax.numpy as jnp
from jax.experimental import pallas as pl
from jax.experimental.pallas import tpu as pltpu


def clam_sb_reg_forward(h, w1, b1, wa, ba, wb, bb, wc, bc, wcls, bcls,
                        *, tile_n=512):
    """CLAM_SB_Reg forward. Weights are pre-transposed to (in, out); biases (1, out)."""
    N, L0 = h.shape
    H = w1.shape[1]
    D = wa.shape[1]
    C = wcls.shape[1]

    # Fuse the two H->D gate projections into one (H, 2D) matmul.
    wab = jnp.concatenate([wa, wb], axis=1)            # (H, 2D)
    bab = jnp.concatenate([ba, bb], axis=1)            # (1, 2D)

    # Effective row tile: multiple of 8, no larger than needed for small bags.
    tile_n = max(8, (int(tile_n) // 8) * 8)
    tile = min(tile_n, max(8, ((N + 7) // 8) * 8))
    n_tiles = (N + tile - 1) // tile
    n_pad = n_tiles * tile
    if n_pad != N:
        h = jnp.pad(h, ((0, n_pad - N), (0, 0)))

    def kernel(x_ref, w1_ref, b1_ref, wab_ref, bab_ref, wc_ref, bc_ref,
               wcls_ref, bcls_ref, out_ref, m_ref, l_ref, acc_ref):
        i = pl.program_id(0)

        @pl.when(i == 0)
        def _init():
            m_ref[...] = jnp.full((1, 1), -jnp.inf, dtype=jnp.float32)
            l_ref[...] = jnp.zeros((1, 1), dtype=jnp.float32)
            acc_ref[...] = jnp.zeros((1, H), dtype=jnp.float32)

        x = x_ref[...]                                               # (t, L0)
        # fc: Linear(L0, H) + ReLU
        hidden = jnp.maximum(
            jnp.dot(x, w1_ref[...], preferred_element_type=jnp.float32)
            + b1_ref[...], 0.0)                                      # (t, H)
        # fused gated attention: one (H, 2D) projection, split, tanh * sigmoid
        ab = (jnp.dot(hidden, wab_ref[...], preferred_element_type=jnp.float32)
              + bab_ref[...])                                        # (t, 2D)
        gated = jnp.tanh(ab[:, :D]) * jax.nn.sigmoid(ab[:, D:])      # (t, D)
        # attention_c: Linear(D, 1) -> raw attention scores
        scores = (jnp.dot(gated, wc_ref[...], preferred_element_type=jnp.float32)
                  + bc_ref[...])                                     # (t, 1)

        # Mask padded rows so they contribute exp(-inf) = 0 to the softmax.
        row = jax.lax.broadcasted_iota(jnp.int32, scores.shape, 0) + i * tile
        scores = jnp.where(row < N, scores, -jnp.inf)

        # Online softmax + weighted pooling over the bag.
        m_prev = m_ref[...]                                          # (1, 1)
        m_new = jnp.maximum(m_prev, jnp.max(scores, axis=0, keepdims=True))
        alpha = jnp.exp(m_prev - m_new)                              # (1, 1)
        p = jnp.exp(scores - m_new)                                  # (t, 1)
        l_ref[...] = alpha * l_ref[...] + jnp.sum(p, axis=0, keepdims=True)
        acc_ref[...] = (alpha * acc_ref[...]
                        + jnp.sum(p * hidden, axis=0, keepdims=True))  # (1, H)
        m_ref[...] = m_new

        @pl.when(i == pl.num_programs(0) - 1)
        def _finalize():
            M = acc_ref[...] / l_ref[...]                            # (1, H)
            logits = (jnp.dot(M, wcls_ref[...],
                              preferred_element_type=jnp.float32)
                      + bcls_ref[...])                               # (1, C)
            out_ref[...] = logits.astype(out_ref.dtype)

    full = lambda i: (0, 0)   # weights / biases: same (whole) block every step

    logits = pl.pallas_call(
        kernel,
        out_shape=jax.ShapeDtypeStruct((1, C), jnp.float32),
        grid_spec=pltpu.PrefetchScalarGridSpec(
            num_scalar_prefetch=0,
            grid=(n_tiles,),
            in_specs=[
                pl.BlockSpec((tile, L0), lambda i: (i, 0)),   # h row tile
                pl.BlockSpec((L0, H), full),                  # W1
                pl.BlockSpec((1, H), full),                   # b1
                pl.BlockSpec((H, 2 * D), full),               # Wa | Wb packed
                pl.BlockSpec((1, 2 * D), full),               # ba | bb packed
                pl.BlockSpec((D, 1), full),                   # Wc
                pl.BlockSpec((1, 1), full),                   # bc
                pl.BlockSpec((H, C), full),                   # Wcls
                pl.BlockSpec((1, C), full),                   # bcls
            ],
            out_specs=pl.BlockSpec((1, C), full),             # logits (final step)
            scratch_shapes=[
                pltpu.VMEM((1, 1), jnp.float32),              # running max
                pltpu.VMEM((1, 1), jnp.float32),              # running denom
                pltpu.VMEM((1, H), jnp.float32),              # running weighted sum
            ],
        ),
        # Row-tile axis carries the online-softmax reduction -> "arbitrary".
        compiler_params=pltpu.CompilerParams(
            dimension_semantics=("arbitrary",)),
    )(h, w1, b1, wab, bab, wc, bc, wcls, bcls)
    return logits


if __name__ == "__main__":
    # Small shapes consistent with the module (real: L0=1024, H=512, D=256,
    # n_classes=10 — scaled down, lane-aligned where it matters).
    N, L0, H, D, C = 200, 256, 128, 128, 10

    key = jax.random.PRNGKey(0)
    ks = jax.random.split(key, 12)
    h    = jax.random.normal(ks[0],  (N, L0), dtype=jnp.float32)
    w1   = jax.random.normal(ks[1],  (L0, H), dtype=jnp.float32) * 0.05
    b1   = jax.random.normal(ks[2],  (1, H),  dtype=jnp.float32) * 0.05
    wa   = jax.random.normal(ks[3],  (H, D),  dtype=jnp.float32) * 0.05
    ba   = jax.random.normal(ks[4],  (1, D),  dtype=jnp.float32) * 0.05
    wb   = jax.random.normal(ks[5],  (H, D),  dtype=jnp.float32) * 0.05
    bb   = jax.random.normal(ks[6],  (1, D),  dtype=jnp.float32) * 0.05
    wc   = jax.random.normal(ks[7],  (D, 1),  dtype=jnp.float32) * 0.05
    bc   = jax.random.normal(ks[8],  (1, 1),  dtype=jnp.float32) * 0.05
    wcls = jax.random.normal(ks[9],  (H, C),  dtype=jnp.float32) * 0.05
    bcls = jax.random.normal(ks[10], (1, C),  dtype=jnp.float32) * 0.05

    # tile_n=64 on N=200 exercises multi-tile accumulation + tail masking.
    logits = clam_sb_reg_forward(h, w1, b1, wa, ba, wb, bb, wc, bc, wcls, bcls,
                                 tile_n=64)
    jax.block_until_ready(logits)

    # Pure-JAX reference (mirrors the PyTorch forward).
    hidden_ref = jnp.maximum(h @ w1 + b1, 0.0)
    a_ref = jnp.tanh(hidden_ref @ wa + ba)
    b_ref = jax.nn.sigmoid(hidden_ref @ wb + bb)
    scores_ref = (a_ref * b_ref) @ wc + bc                 # (N, 1)
    attn_ref = jax.nn.softmax(scores_ref.T, axis=1)        # (1, N)
    M_ref = attn_ref @ hidden_ref                          # (1, H)
    logits_ref = M_ref @ wcls + bcls                       # (1, C)

    assert logits.shape == (1, C)
    assert jnp.allclose(logits, logits_ref, atol=2e-4, rtol=2e-4), (
        jnp.max(jnp.abs(logits - logits_ref)))

    print("KERNEL_OK")
</pallas_src>

<mosaic_0001>
module attributes {stable_mosaic.version = 11 : i64} {
  func.func @kernel(%arg0: i32, %arg1: memref<64x256xf32, #tpu.memory_space<vmem>>, %arg2: memref<256x128xf32, #tpu.memory_space<vmem>>, %arg3: memref<1x128xf32, #tpu.memory_space<vmem>>, %arg4: memref<128x256xf32, #tpu.memory_space<vmem>>, %arg5: memref<1x256xf32, #tpu.memory_space<vmem>>, %arg6: memref<128x1xf32, #tpu.memory_space<vmem>>, %arg7: memref<1x1xf32, #tpu.memory_space<vmem>>, %arg8: memref<128x10xf32, #tpu.memory_space<vmem>>, %arg9: memref<1x10xf32, #tpu.memory_space<vmem>>, %arg10: memref<1x10xf32, #tpu.memory_space<vmem>>, %arg11: memref<1x1xf32, #tpu.memory_space<vmem>>, %arg12: memref<1x1xf32, #tpu.memory_space<vmem>>, %arg13: memref<1x128xf32, #tpu.memory_space<vmem>>) attributes {dimension_semantics = [#tpu.dimension_semantics<arbitrary>], iteration_bounds = array<i64: 4>, scalar_prefetch = 0 : i64, scratch_operands = 3 : i64, tpu.core_type = #tpu.core_type<tc>, window_params = [{transform_indices = @transform_0, window_bounds = array<i64: 64, 256>}, {pipeline_mode = #tpu.pipeline_mode<synchronous>, transform_indices = @transform_1, window_bounds = array<i64: 256, 128>}, {pipeline_mode = #tpu.pipeline_mode<synchronous>, transform_indices = @transform_2, window_bounds = array<i64: 1, 128>}, {pipeline_mode = #tpu.pipeline_mode<synchronous>, transform_indices = @transform_3, window_bounds = array<i64: 128, 256>}, {pipeline_mode = #tpu.pipeline_mode<synchronous>, transform_indices = @transform_4, window_bounds = array<i64: 1, 256>}, {pipeline_mode = #tpu.pipeline_mode<synchronous>, transform_indices = @transform_5, window_bounds = array<i64: 128, 1>}, {pipeline_mode = #tpu.pipeline_mode<synchronous>, transform_indices = @transform_6, window_bounds = array<i64: 1, 1>}, {pipeline_mode = #tpu.pipeline_mode<synchronous>, transform_indices = @transform_7, window_bounds = array<i64: 128, 10>}, {pipeline_mode = #tpu.pipeline_mode<synchronous>, transform_indices = @transform_8, window_bounds = array<i64: 1, 10>}, {pipeline_mode = #tpu.pipeline_mode<synchronous>, transform_indices = @transform_9, window_bounds = array<i64: 1, 10>}]} {
    %c0_i32 = arith.constant 0 : i32
    %0 = arith.cmpi eq, %arg0, %c0_i32 : i32
    %1 = arith.extui %0 : i1 to i32
    %c0_i32_0 = arith.constant 0 : i32
    %2 = arith.cmpi ne, %1, %c0_i32_0 : i32
    scf.if %2 {
      %cst_35 = arith.constant 0xFF800000 : f32
      %66 = vector.broadcast %cst_35 : f32 to vector<1x1xf32>
      %c0_36 = arith.constant 0 : index
      %c0_37 = arith.constant 0 : index
      %67 = vector.load %arg11[%c0_36, %c0_37] : memref<1x1xf32, #tpu.memory_space<vmem>>, vector<1x1xf32>
      tpu.vector_store %arg11[%c0_36, %c0_37], %66 {strides = array<i32>} : memref<1x1xf32, #tpu.memory_space<vmem>>, vector<1x1xf32>,
      %cst_38 = arith.constant 0.000000e+00 : f32
      %68 = vector.broadcast %cst_38 : f32 to vector<1x1xf32>
      %c0_39 = arith.constant 0 : index
      %c0_40 = arith.constant 0 : index
      %69 = vector.load %arg12[%c0_39, %c0_40] : memref<1x1xf32, #tpu.memory_space<vmem>>, vector<1x1xf32>
      tpu.vector_store %arg12[%c0_39, %c0_40], %68 {strides = array<i32>} : memref<1x1xf32, #tpu.memory_space<vmem>>, vector<1x1xf32>,
      %cst_41 = arith.constant 0.000000e+00 : f32
      %70 = vector.broadcast %cst_41 : f32 to vector<1x128xf32>
      %c0_42 = arith.constant 0 : index
      %c0_43 = arith.constant 0 : index
      %71 = vector.load %arg13[%c0_42, %c0_43] : memref<1x128xf32, #tpu.memory_space<vmem>>, vector<1x128xf32>
      tpu.vector_store %arg13[%c0_42, %c0_43], %70 {strides = array<i32>} : memref<1x128xf32, #tpu.memory_space<vmem>>, vector<1x128xf32>,
    } else {
    }
    %c0 = arith.constant 0 : index
    %c0_1 = arith.constant 0 : index
    %3 = vector.load %arg1[%c0, %c0_1] : memref<64x256xf32, #tpu.memory_space<vmem>>, vector<64x256xf32>
    %c0_2 = arith.constant 0 : index
    %c0_3 = arith.constant 0 : index
    %4 = vector.load %arg2[%c0_2, %c0_3] : memref<256x128xf32, #tpu.memory_space<vmem>>, vector<256x128xf32>
    %cst = arith.constant dense<0.000000e+00> : vector<64x128xf32>
    %5 = tpu.matmul %3, %4, %cst {dimension_numbers = #tpu.dot_dimension_numbers<[1], [0], [0], [1], [0, 0, 1, 1], [], []>} : vector<64x256xf32>, vector<256x128xf32>, vector<64x128xf32> -> vector<64x128xf32>
    %c0_4 = arith.constant 0 : index
    %c0_5 = arith.constant 0 : index
    %6 = vector.load %arg3[%c0_4, %c0_5] : memref<1x128xf32, #tpu.memory_space<vmem>>, vector<1x128xf32>
    %7 = vector.broadcast %6 : vector<1x128xf32> to vector<64x128xf32>
    %8 = arith.addf %5, %7 : vector<64x128xf32>
    %cst_6 = arith.constant 0.000000e+00 : f32
    %9 = vector.broadcast %cst_6 : f32 to vector<64x128xf32>
    %10 = arith.maximumf %8, %9 : vector<64x128xf32>
    %c0_7 = arith.constant 0 : index
    %c0_8 = arith.constant 0 : index
    %11 = vector.load %arg4[%c0_7, %c0_8] : memref<128x256xf32, #tpu.memory_space<vmem>>, vector<128x256xf32>
    %cst_9 = arith.constant dense<0.000000e+00> : vector<64x256xf32>
    %12 = tpu.matmul %10, %11, %cst_9 {dimension_numbers = #tpu.dot_dimension_numbers<[1], [0], [0], [1], [0, 0, 1, 1], [], []>} : vector<64x128xf32>, vector<128x256xf32>, vector<64x256xf32> -> vector<64x256xf32>
    %c0_10 = arith.constant 0 : index
    %c0_11 = arith.constant 0 : index
    %13 = vector.load %arg5[%c0_10, %c0_11] : memref<1x256xf32, #tpu.memory_space<vmem>>, vector<1x256xf32>
    %14 = vector.broadcast %13 : vector<1x256xf32> to vector<64x256xf32>
    %15 = arith.addf %12, %14 : vector<64x256xf32>
    %16 = vector.extract_strided_slice %15 {offsets = [0, 0], sizes = [64, 128], strides = [1, 1]} : vector<64x256xf32> to vector<64x128xf32>
    %17 = math.tanh %16 : vector<64x128xf32>
    %18 = vector.extract_strided_slice %15 {offsets = [0, 128], sizes = [64, 128], strides = [1, 1]} : vector<64x256xf32> to vector<64x128xf32>
    %19 = arith.negf %18 : vector<64x128xf32>
    %20 = math.exp %19 : vector<64x128xf32>
    %cst_12 = arith.constant 1.000000e+00 : f32
    %21 = vector.broadcast %cst_12 : f32 to vector<64x128xf32>
    %22 = arith.addf %21, %20 : vector<64x128xf32>
    %23 = arith.divf %21, %22 : vector<64x128xf32>
    %24 = arith.mulf %17, %23 : vector<64x128xf32>
    %c0_13 = arith.constant 0 : index
    %c0_14 = arith.constant 0 : index
    %25 = vector.load %arg6[%c0_13, %c0_14] : memref<128x1xf32, #tpu.memory_space<vmem>>, vector<128x1xf32>
    %cst_15 = arith.constant dense<0.000000e+00> : vector<64x1xf32>
    %26 = tpu.matmul %24, %25, %cst_15 {dimension_numbers = #tpu.dot_dimension_numbers<[1], [0], [0], [1], [0, 0, 1, 1], [], []>} : vector<64x128xf32>, vector<128x1xf32>, vector<64x1xf32> -> vector<64x1xf32>
    %c0_16 = arith.constant 0 : index
    %c0_17 = arith.constant 0 : index
    %27 = vector.load %arg7[%c0_16, %c0_17] : memref<1x1xf32, #tpu.memory_space<vmem>>, vector<1x1xf32>
    %28 = vector.broadcast %27 : vector<1x1xf32> to vector<64x1xf32>
    %29 = arith.addf %26, %28 : vector<64x1xf32>
    %30 = tpu.iota {dimensions = array<i32: 0>} : vector<64x1xi32>
    %c64_i32 = arith.constant 64 : i32
    %31 = arith.muli %arg0, %c64_i32 : i32
    %32 = vector.broadcast %31 : i32 to vector<64x1xi32>
    %33 = arith.addi %30, %32 : vector<64x1xi32>
    %c200_i32 = arith.constant 200 : i32
    %34 = vector.broadcast %c200_i32 : i32 to vector<64x1xi32>
    %35 = arith.cmpi slt, %33, %34 : vector<64x1xi32>
    %cst_18 = arith.constant 0xFF800000 : f32
    %36 = vector.broadcast %cst_18 : f32 to vector<64x1xf32>
    %37 = arith.select %35, %29, %36 : vector<64x1xi1>, vector<64x1xf32>
    %c0_19 = arith.constant 0 : index
    %c0_20 = arith.constant 0 : index
    %38 = vector.load %arg11[%c0_19, %c0_20] : memref<1x1xf32, #tpu.memory_space<vmem>>, vector<1x1xf32>
    %cst_21 = arith.constant dense<0xFF800000> : vector<1xf32>
    %39 = vector.multi_reduction <maximumf>, %37, %cst_21 [0] : vector<64x1xf32> to vector<1xf32>
    %40 = vector.shape_cast %39 : vector<1xf32> to vector<1x1xf32>
    %41 = arith.maximumf %38, %40 : vector<1x1xf32>
    %42 = arith.subf %38, %41 : vector<1x1xf32>
    %43 = math.exp %42 : vector<1x1xf32>
    %44 = vector.broadcast %41 : vector<1x1xf32> to vector<64x1xf32>
    %45 = arith.subf %37, %44 : vector<64x1xf32>
    %46 = math.exp %45 : vector<64x1xf32>
    %c0_22 = arith.constant 0 : index
    %c0_23 = arith.constant 0 : index
    %47 = vector.load %arg12[%c0_22, %c0_23] : memref<1x1xf32, #tpu.memory_space<vmem>>, vector<1x1xf32>
    %48 = arith.mulf %43, %47 : vector<1x1xf32>
    %cst_24 = arith.constant dense<0.000000e+00> : vector<1xf32>
    %49 = vector.multi_reduction <add>, %46, %cst_24 [0] : vector<64x1xf32> to vector<1xf32>
    %50 = vector.shape_cast %49 : vector<1xf32> to vector<1x1xf32>
    %51 = arith.addf %48, %50 : vector<1x1xf32>
    %c0_25 = arith.constant 0 : index
    %c0_26 = arith.constant 0 : index
    %52 = vector.load %arg12[%c0_25, %c0_26] : memref<1x1xf32, #tpu.memory_space<vmem>>, vector<1x1xf32>
    tpu.vector_store %arg12[%c0_25, %c0_26], %51 {strides = array<i32>} : memref<1x1xf32, #tpu.memory_space<vmem>>, vector<1x1xf32>,
    %c0_27 = arith.constant 0 : index
    %c0_28 = arith.constant 0 : index
    %53 = vector.load %arg13[%c0_27, %c0_28] : memref<1x128xf32, #tpu.memory_space<vmem>>, vector<1x128xf32>
    %54 = vector.broadcast %43 : vector<1x1xf32> to vector<1x128xf32>
    %55 = arith.mulf %54, %53 : vector<1x128xf32>
    %56 = vector.broadcast %46 : vector<64x1xf32> to vector<64x128xf32>
    %57 = arith.mulf %56, %10 : vector<64x128xf32>
    %cst_29 = arith.constant dense<0.000000e+00> : vector<128xf32>
    %58 = vector.multi_reduction <add>, %57, %cst_29 [0] : vector<64x128xf32> to vector<128xf32>
    %59 = vector.shape_cast %58 : vector<128xf32> to vector<1x128xf32>
    %60 = arith.addf %55, %59 : vector<1x128xf32>
    %c0_30 = arith.constant 0 : index
    %c0_31 = arith.constant 0 : index
    %61 = vector.load %arg13[%c0_30, %c0_31] : memref<1x128xf32, #tpu.memory_space<vmem>>, vector<1x128xf32>
    tpu.vector_store %arg13[%c0_30, %c0_31], %60 {strides = array<i32>} : memref<1x128xf32, #tpu.memory_space<vmem>>, vector<1x128xf32>,
    %c0_32 = arith.constant 0 : index
    %c0_33 = arith.constant 0 : index
    %62 = vector.load %arg11[%c0_32, %c0_33] : memref<1x1xf32, #tpu.memory_space<vmem>>, vector<1x1xf32>
    tpu.vector_store %arg11[%c0_32, %c0_33], %41 {strides = array<i32>} : memref<1x1xf32, #tpu.memory_space<vmem>>, vector<1x1xf32>,
    %c3_i32 = arith.constant 3 : i32
    %63 = arith.cmpi eq, %arg0, %c3_i32 : i32
    %64 = arith.extui %63 : i1 to i32
    %c0_i32_34 = arith.constant 0 : i32
    %65 = arith.cmpi ne, %64, %c0_i32_34 : i32
    scf.if %65 {
      %c0_35 = arith.constant 0 : index
      %c0_36 = arith.constant 0 : index
      %66 = vector.load %arg13[%c0_35, %c0_36] : memref<1x128xf32, #tpu.memory_space<vmem>>, vector<1x128xf32>
      %c0_37 = arith.constant 0 : index
      %c0_38 = arith.constant 0 : index
      %67 = vector.load %arg12[%c0_37, %c0_38] : memref<1x1xf32, #tpu.memory_space<vmem>>, vector<1x1xf32>
      %68 = vector.broadcast %67 : vector<1x1xf32> to vector<1x128xf32>
      %69 = arith.divf %66, %68 : vector<1x128xf32>
      %c0_39 = arith.constant 0 : index
      %c0_40 = arith.constant 0 : index
      %70 = vector.load %arg8[%c0_39, %c0_40] : memref<128x10xf32, #tpu.memory_space<vmem>>, vector<128x10xf32>
      %cst_41 = arith.constant dense<0.000000e+00> : vector<1x10xf32>
      %71 = tpu.matmul %69, %70, %cst_41 {dimension_numbers = #tpu.dot_dimension_numbers<[1], [0], [0], [1], [0, 0, 1, 1], [], []>} : vector<1x128xf32>, vector<128x10xf32>, vector<1x10xf32> -> vector<1x10xf32>
      %c0_42 = arith.constant 0 : index
      %c0_43 = arith.constant 0 : index
      %72 = vector.load %arg9[%c0_42, %c0_43] : memref<1x10xf32, #tpu.memory_space<vmem>>, vector<1x10xf32>
      %73 = arith.addf %71, %72 : vector<1x10xf32>
      %c0_44 = arith.constant 0 : index
      %c0_45 = arith.constant 0 : index
      %74 = vector.load %arg10[%c0_44, %c0_45] : memref<1x10xf32, #tpu.memory_space<vmem>>, vector<1x10xf32>
      tpu.vector_store %arg10[%c0_44, %c0_45], %73 {strides = array<i32>} : memref<1x10xf32, #tpu.memory_space<vmem>>, vector<1x10xf32>,
    } else {
    }
    return
  }
  func.func @transform_0(%arg0: i32) -> (i32, i32) {
    %c0_i32 = arith.constant 0 : i32
    %c0_i32_0 = arith.constant 0 : i32
    return %arg0, %c0_i32 : i32, i32
  }
  func.func @transform_1(%arg0: i32) -> (i32, i32) {
    %c0_i32 = arith.constant 0 : i32
    %c0_i32_0 = arith.constant 0 : i32
    %c0_i32_1 = arith.constant 0 : i32
    return %c0_i32, %c0_i32_0 : i32, i32
  }
  func.func @transform_2(%arg0: i32) -> (i32, i32) {
    %c0_i32 = arith.constant 0 : i32
    %c0_i32_0 = arith.constant 0 : i32
    %c0_i32_1 = arith.constant 0 : i32
    return %c0_i32, %c0_i32_0 : i32, i32
  }
  func.func @transform_3(%arg0: i32) -> (i32, i32) {
    %c0_i32 = arith.constant 0 : i32
    %c0_i32_0 = arith.constant 0 : i32
    %c0_i32_1 = arith.constant 0 : i32
    return %c0_i32, %c0_i32_0 : i32, i32
  }
  func.func @transform_4(%arg0: i32) -> (i32, i32) {
    %c0_i32 = arith.constant 0 : i32
    %c0_i32_0 = arith.constant 0 : i32
    %c0_i32_1 = arith.constant 0 : i32
    return %c0_i32, %c0_i32_0 : i32, i32
  }
  func.func @transform_5(%arg0: i32) -> (i32, i32) {
    %c0_i32 = arith.constant 0 : i32
    %c0_i32_0 = arith.constant 0 : i32
    %c0_i32_1 = arith.constant 0 : i32
    return %c0_i32, %c0_i32_0 : i32, i32
  }
  func.func @transform_6(%arg0: i32) -> (i32, i32) {
    %c0_i32 = arith.constant 0 : i32
    %c0_i32_0 = arith.constant 0 : i32
    %c0_i32_1 = arith.constant 0 : i32
    return %c0_i32, %c0_i32_0 : i32, i32
  }
  func.func @transform_7(%arg0: i32) -> (i32, i32) {
    %c0_i32 = arith.constant 0 : i32
    %c0_i32_0 = arith.constant 0 : i32
    %c0_i32_1 = arith.constant 0 : i32
    return %c0_i32, %c0_i32_0 : i32, i32
  }
  func.func @transform_8(%arg0: i32) -> (i32, i32) {
    %c0_i32 = arith.constant 0 : i32
    %c0_i32_0 = arith.constant 0 : i32
    %c0_i32_1 = arith.constant 0 : i32
    return %c0_i32, %c0_i32_0 : i32, i32
  }
  func.func @transform_9(%arg0: i32) -> (i32, i32) {
    %c0_i32 = arith.constant 0 : i32
    %c0_i32_0 = arith.constant 0 : i32
    %c0_i32_1 = arith.constant 0 : i32
    return %c0_i32, %c0_i32_0 : i32, i32
  }
}

</mosaic_0001>

<llo_original>
// kernel: tpu_custom_call.1
$region0: #{tpu_custom_call.1}
  #allocation0 [shape = 'u32[]', space=smem, size = 0x4, offset = 0x4, fixed_abs, tag = 'smem constant byte address 0x4 - core index']
  #allocation1 [shape = 'u32[72,128]{1,0:T(1,128)}', space=vmem, size = 0x9000, scoped, tag = 'internal scratch']
  #allocation2 [shape = 'f32[1,1]{1,0:T(1,128)}', space=vmem, size = 0x200, scoped, tag = 'scratch operand']
  #allocation3 [shape = 'f32[1,1]{1,0:T(1,128)}', space=vmem, size = 0x200, scoped, tag = 'scratch operand']
  #allocation4 [shape = 'f32[1,128]{1,0:T(1,128)}', space=vmem, size = 0x200, scoped, tag = 'scratch operand']
  #allocation5 [shape = 'f32[1,1]{1,0:T(1,128)S(1)}', space=vmem, size = 0x200, scoped, tag = 'scoped memory for tpu_custom_call.1']
  %s0 = inlined_call_operand.hbm [shape: f32[256,256], index: 0, kind: input, shape index: {}]
  %s1 = inlined_call_operand.vmem [shape: f32[256,128], index: 1, kind: input, shape index: {}]
  %s2 = inlined_call_operand.vmem [shape: f32[1,128], index: 2, kind: input, shape index: {}]
  %s3 = inlined_call_operand.hbm [shape: f32[128,256], index: 3, kind: input, shape index: {}]
  %s4 = inlined_call_operand.vmem [shape: f32[1,256], index: 4, kind: input, shape index: {}]
  %s5 = inlined_call_operand.vmem [shape: f32[128,1], index: 5, kind: input, shape index: {}]
  %s6 = inlined_call_operand.<no memory space> [shape: f32[1,1], index: 6, kind: input, shape index: {}]
  %s7 = inlined_call_operand.vmem [shape: f32[128,10], index: 7, kind: input, shape index: {}]
  %s8 = inlined_call_operand.vmem [shape: f32[1,10], index: 8, kind: input, shape index: {}]
  %s9 = inlined_call_operand.hbm [shape: f32[1,10], index: 9, kind: output, shape index: {}]
  %s10 = sld [smem:[#allocation0]]
  $region85: #{tpu_custom_call.1} parent=0
    _
  %s12 = ssub.s32 1, %s10
  %s13 = scalar_select 0, %s12, %s10
  %v14 = vstv %s6
  %15 = vst [vmem:[#allocation5] sm:$0x1] %v14
  $region1: #{tpu_custom_call.1} parent=0
    #allocation6 [shape = 'u8[131072]{0}', space=vmem, size = 0x20000, scoped, tag = 'input window, operand 0']
    #allocation7 [shape = 's32[2]{0}', space=sflag, size = 0x8, scoped, tag = 'scoped memory for tpu_custom_call.1']
    #allocation8 [shape = 's32[2]{0}', space=sflag, size = 0x8, scoped, tag = 'scoped memory for tpu_custom_call.1']
    #allocation9 [shape = 'u8[131072]{0}', space=vmem, size = 0x20000, scoped, tag = 'input window, operand 3, single buffered']
    #allocation10 [shape = 's32[1]{0}', space=sflag, size = 0x4, scoped, tag = 'scoped memory for tpu_custom_call.1']
    #allocation11 [shape = 'u8[512]{0}', space=vmem, size = 0x400, scoped, tag = 'output window, operand 0, single buffered']
    %16 = vsyncpa [#allocation7], 0
    %s17 = scalar_lea.sflag [#allocation7], 1
    %18 = vsyncpa %s17, 0
    %19 = vsyncpa [#allocation10], 0
    %20 = vsyncpa [#allocation8], 0
    loop: start=0, step=1, limit=6
    $region2: #{tpu_custom_call.1} parent=1 // loop_pre_header
      _
    $region3: #{tpu_custom_call.1} parent=1 // loop_header
      %s22 = sphi 0, %s26
      %p23 = scmp.ge.s32.totalorder %s22, 6
      %s32 = sphi 0, %s34
      %s35 = sphi 0, %s32
      %s36 = sphi 0, %s35
      %s52 = sphi 0, %s36
      %s56 = sphi 0, %s56
      %s58 = sphi 0, %s56
      %s59 = sphi 0, %s58
      %s73 = sphi 0, %s59
      %s77 = sphi 0, %s77
      %s79 = sphi 0, %s77
      %s80 = sphi 0, %s79
      %s94 = sphi 0, %s80
      %s98 = sphi 0, %s98
      %s100 = sphi 0, %s98
      %s101 = sphi 0, %s100
      %s115 = sphi 0, %s101
      %s119 = sphi 0, %s119
      %s121 = sphi 0, %s119
      %s122 = sphi 0, %s121
      %s136 = sphi 0, %s122
      %s140 = sphi 0, %s140
      %s142 = sphi 0, %s140
      %s143 = sphi 0, %s142
      %s157 = sphi 0, %s143
      %s161 = sphi 0, %s161
      %s163 = sphi 0, %s161
      %s164 = sphi 0, %s163
      %s178 = sphi 0, %s164
      %s182 = sphi 0, %s182
      %s184 = sphi 0, %s182
      %s185 = sphi 0, %s184
      %s199 = sphi 0, %s185
      %s203 = sphi 0, %s203
      %s205 = sphi 0, %s203
      %s206 = sphi 0, %s205
      %s220 = sphi 0, %s206
      %s224 = sphi 0, %s224
      %s226 = sphi 0, %s224
      %s227 = sphi 0, %s226
      %s241 = sphi 0, %s227
    $region4: #{tpu_custom_call.1} parent=1 // loop_header_branch
      %25 = sbr.rel (%p23) target = $region8
    $region5: #{tpu_custom_call.1} parent=1 // loop_body
      %s27 = ssub.s32 %s22, 1
      %s28 = ssub.s32 %s22, 2
      %s29 = sadd.s32 %s22, 1
      %s30 = ssub.s32 %s22, %s29
      %p31 = scmp.eq.s32.totalorder %s30, 0
      %s33 = sadd.s32 %s32, 1
      %s34 = scalar_select %p31, %s32, %s33
      %p37 = pneg %p31
      %p38 = scmp.eq.s32.totalorder %s22, 3
      %p39 = por %p37, %p38
      %p40 = scmp.ne.s32.totalorder %s32, %s35
      %p41 = scmp.eq.s32.totalorder %s22, 0
      %p42 = por %p40, %p41
      %p43 = scmp.ne.s32.totalorder %s32, %s35
      %p44 = scmp.eq.s32.totalorder %s27, 3
      %p45 = por %p43, %p44
      %p46 = scmp.ne.s32.totalorder %s35, %s36
      %p47 = scmp.eq.s32.totalorder %s27, 0
      %p48 = por %p46, %p47
      %p49 = scmp.ne.s32.totalorder %s35, %s36
      %p50 = scmp.eq.s32.totalorder %s28, 3
      %p51 = por %p49, %p50
      %p53 = scmp.ne.s32.totalorder %s36, %s52
      %p54 = scmp.eq.s32.totalorder %s28, 0
      %p55 = por %p53, %p54
      %s57 = sadd.s32 %s56, 1
      %p60 = scmp.eq.s32.totalorder %s22, 3
      %p61 = scmp.ne.s32.totalorder %s56, %s58
      %p62 = scmp.eq.s32.totalorder %s22, 0
      %p63 = por %p61, %p62
      %p64 = scmp.ne.s32.totalorder %s56, %s58
      %p65 = scmp.eq.s32.totalorder %s27, 3
      %p66 = por %p64, %p65
      %p67 = scmp.ne.s32.totalorder %s58, %s59
      %p68 = scmp.eq.s32.totalorder %s27, 0
      %p69 = por %p67, %p68
      %p70 = scmp.ne.s32.totalorder %s58, %s59
      %p71 = scmp.eq.s32.totalorder %s28, 3
      %p72 = por %p70, %p71
      %p74 = scmp.ne.s32.totalorder %s59, %s73
      %p75 = scmp.eq.s32.totalorder %s28, 0
      %p76 = por %p74, %p75
      %s78 = sadd.s32 %s77, 1
      %p81 = scmp.eq.s32.totalorder %s22, 3
      %p82 = scmp.ne.s32.totalorder %s77, %s79
      %p83 = scmp.eq.s32.totalorder %s22, 0
      %p84 = por %p82, %p83
      %p85 = scmp.ne.s32.totalorder %s77, %s79
      %p86 = scmp.eq.s32.totalorder %s27, 3
      %p87 = por %p85, %p86
      %p88 = scmp.ne.s32.totalorder %s79, %s80
      %p89 = scmp.eq.s32.totalorder %s27, 0
      %p90 = por %p88, %p89
      %p91 = scmp.ne.s32.totalorder %s79, %s80
      %p92 = scmp.eq.s32.totalorder %s28, 3
      %p93 = por %p91, %p92
      %p95 = scmp.ne.s32.totalorder %s80, %s94
      %p96 = scmp.eq.s32.totalorder %s28, 0
      %p97 = por %p95, %p96
      %s99 = sadd.s32 %s98, 1
      %p102 = scmp.eq.s32.totalorder %s22, 3
      %p103 = scmp.ne.s32.totalorder %s98, %s100
      %p104 = scmp.eq.s32.totalorder %s22, 0
      %p105 = por %p103, %p104
      %p106 = scmp.ne.s32.totalorder %s98, %s100
      %p107 = scmp.eq.s32.totalorder %s27, 3
      %p108 = por %p106, %p107
      %p109 = scmp.ne.s32.totalorder %s100, %s101
      %p110 = scmp.eq.s32.totalorder %s27, 0
      %p111 = por %p109, %p110
      %p112 = scmp.ne.s32.totalorder %s100, %s101
      %p113 = scmp.eq.s32.totalorder %s28, 3
      %p114 = por %p112, %p113
      %p116 = scmp.ne.s32.totalorder %s101, %s115
      %p117 = scmp.eq.s32.totalorder %s28, 0
      %p118 = por %p116, %p117
      %s120 = sadd.s32 %s119, 1
      %p123 = scmp.eq.s32.totalorder %s22, 3
      %p124 = scmp.ne.s32.totalorder %s119, %s121
      %p125 = scmp.eq.s32.totalorder %s22, 0
      %p126 = por %p124, %p125
      %p127 = scmp.ne.s32.totalorder %s119, %s121
      %p128 = scmp.eq.s32.totalorder %s27, 3
      %p129 = por %p127, %p128
      %p130 = scmp.ne.s32.totalorder %s121, %s122
      %p131 = scmp.eq.s32.totalorder %s27, 0
      %p132 = por %p130, %p131
      %p133 = scmp.ne.s32.totalorder %s121, %s122
      %p134 = scmp.eq.s32.totalorder %s28, 3
      %p135 = por %p133, %p134
      %p137 = scmp.ne.s32.totalorder %s122, %s136
      %p138 = scmp.eq.s32.totalorder %s28, 0
      %p139 = por %p137, %p138
      %s141 = sadd.s32 %s140, 1
      %p144 = scmp.eq.s32.totalorder %s22, 3
      %p145 = scmp.ne.s32.totalorder %s140, %s142
      %p146 = scmp.eq.s32.totalorder %s22, 0
      %p147 = por %p145, %p146
      %p148 = scmp.ne.s32.totalorder %s140, %s142
      %p149 = scmp.eq.s32.totalorder %s27, 3
      %p150 = por %p148, %p149
      %p151 = scmp.ne.s32.totalorder %s142, %s143
      %p152 = scmp.eq.s32.totalorder %s27, 0
      %p153 = por %p151, %p152
      %p154 = scmp.ne.s32.totalorder %s142, %s143
      %p155 = scmp.eq.s32.totalorder %s28, 3
      %p156 = por %p154, %p155
      %p158 = scmp.ne.s32.totalorder %s143, %s157
      %p159 = scmp.eq.s32.totalorder %s28, 0
      %p160 = por %p158, %p159
      %s162 = sadd.s32 %s161, 1
      %p165 = scmp.eq.s32.totalorder %s22, 3
      %p166 = scmp.ne.s32.totalorder %s161, %s163
      %p167 = scmp.eq.s32.totalorder %s22, 0
      %p168 = por %p166, %p167
      %p169 = scmp.ne.s32.totalorder %s161, %s163
      %p170 = scmp.eq.s32.totalorder %s27, 3
      %p171 = por %p169, %p170
      %p172 = scmp.ne.s32.totalorder %s163, %s164
      %p173 = scmp.eq.s32.totalorder %s27, 0
      %p174 = por %p172, %p173
      %p175 = scmp.ne.s32.totalorder %s163, %s164
      %p176 = scmp.eq.s32.totalorder %s28, 3
      %p177 = por %p175, %p176
      %p179 = scmp.ne.s32.totalorder %s164, %s178
      %p180 = scmp.eq.s32.totalorder %s28, 0
      %p181 = por %p179, %p180
      %s183 = sadd.s32 %s182, 1
      %p186 = scmp.eq.s32.totalorder %s22, 3
      %p187 = scmp.ne.s32.totalorder %s182, %s184
      %p188 = scmp.eq.s32.totalorder %s22, 0
      %p189 = por %p187, %p188
      %p190 = scmp.ne.s32.totalorder %s182, %s184
      %p191 = scmp.eq.s32.totalorder %s27, 3
      %p192 = por %p190, %p191
      %p193 = scmp.ne.s32.totalorder %s184, %s185
      %p194 = scmp.eq.s32.totalorder %s27, 0
      %p195 = por %p193, %p194
      %p196 = scmp.ne.s32.totalorder %s184, %s185
      %p197 = scmp.eq.s32.totalorder %s28, 3
      %p198 = por %p196, %p197
      %p200 = scmp.ne.s32.totalorder %s185, %s199
      %p201 = scmp.eq.s32.totalorder %s28, 0
      %p202 = por %p200, %p201
      %s204 = sadd.s32 %s203, 1
      %p207 = scmp.eq.s32.totalorder %s22, 3
      %p208 = scmp.ne.s32.totalorder %s203, %s205
      %p209 = scmp.eq.s32.totalorder %s22, 0
      %p210 = por %p208, %p209
      %p211 = scmp.ne.s32.totalorder %s203, %s205
      %p212 = scmp.eq.s32.totalorder %s27, 3
      %p213 = por %p211, %p212
      %p214 = scmp.ne.s32.totalorder %s205, %s206
      %p215 = scmp.eq.s32.totalorder %s27, 0
      %p216 = por %p214, %p215
      %p217 = scmp.ne.s32.totalorder %s205, %s206
      %p218 = scmp.eq.s32.totalorder %s28, 3
      %p219 = por %p217, %p218
      %p221 = scmp.ne.s32.totalorder %s206, %s220
      %p222 = scmp.eq.s32.totalorder %s28, 0
      %p223 = por %p221, %p222
      %s225 = sadd.s32 %s224, 1
      %p228 = scmp.eq.s32.totalorder %s22, 3
      %p229 = scmp.ne.s32.totalorder %s224, %s226
      %p230 = scmp.eq.s32.totalorder %s22, 0
      %p231 = por %p229, %p230
      %p232 = scmp.ne.s32.totalorder %s224, %s226
      %p233 = scmp.eq.s32.totalorder %s27, 3
      %p234 = por %p232, %p233
      %p235 = scmp.ne.s32.totalorder %s226, %s227
      %p236 = scmp.eq.s32.totalorder %s27, 0
      %p237 = por %p235, %p236
      %p238 = scmp.ne.s32.totalorder %s226, %s227
      %p239 = scmp.eq.s32.totalorder %s28, 3
      %p240 = por %p238, %p239
      %p242 = scmp.ne.s32.totalorder %s227, %s241
      %p243 = scmp.eq.s32.totalorder %s28, 0
      %p244 = por %p242, %p243
      %p245 = scmp.le.s32.totalorder 1, %s22
      %p246 = scmp.lt.s32.totalorder %s22, 5
      %p247 = pnand %p245, %p246
      %p248 = pneg %p247
      // Predicated region
      $region9: #{tpu_custom_call.1} parent=5 // pred_check
        _
      $region10: #{tpu_custom_call.1} parent=5 // pred_check_branch
        %250 = sbr.rel (%p247) target = $region12
      $region11: #{tpu_custom_call.1} parent=5 // pred_region
        %s251 = ssub.s32 %s22, 1
        // Predicated region
        $region13: #{tpu_custom_call.1} parent=11 // pred_check
          %p252 = pneg %p69
        $region14: #{tpu_custom_call.1} parent=11 // pred_check_branch
          %254 = sbr.rel (%p252) target = $region16
        $region15: #{tpu_custom_call.1} parent=11 // pred_region
          _
        $region16: #{tpu_custom_call.1} parent=11 // pred_fallthru
          _
        // Predicated region
        $region17: #{tpu_custom_call.1} parent=11 // pred_check
          %p255 = pneg %p90
        $region18: #{tpu_custom_call.1} parent=11 // pred_check_branch
          %257 = sbr.rel (%p255) target = $region20
        $region19: #{tpu_custom_call.1} parent=11 // pred_region
          _
        $region20: #{tpu_custom_call.1} parent=11 // pred_fallthru
          _
        // Predicated region
        $region21: #{tpu_custom_call.1} parent=11 // pred_check
          %p258 = pneg %p111
        $region22: #{tpu_custom_call.1} parent=11 // pred_check_branch
          %260 = sbr.rel (%p258) target = $region24
        $region23: #{tpu_custom_call.1} parent=11 // pred_region
          %262 = vsyncadd [#allocation10], 0
          %s263 = sshll.u32 %s3, 4
          %s264 = int_to_ptr.hbm [resolvable:$true] %s263
          %s265 = sshll.u32 [#allocation9], 4
          %s266 = int_to_ptr.vmem [resolvable:$true] %s265
          %271 = dma.hbm_to_vmem [thread:$0]  %s264, 4096, %s266, [#allocation10], 256, 256, 16
        $region24: #{tpu_custom_call.1} parent=11 // pred_fallthru
          _
        // Predicated region
        $region25: #{tpu_custom_call.1} parent=11 // pred_check
          %p272 = pneg %p132
        $region26: #{tpu_custom_call.1} parent=11 // pred_check_branch
          %274 = sbr.rel (%p272) target = $region28
        $region27: #{tpu_custom_call.1} parent=11 // pred_region
          _
        $region28: #{tpu_custom_call.1} parent=11 // pred_fallthru
          _
        // Predicated region
        $region29: #{tpu_custom_call.1} parent=11 // pred_check
          %p275 = pneg %p153
        $region30: #{tpu_custom_call.1} parent=11 // pred_check_branch
          %277 = sbr.rel (%p275) target = $region32
        $region31: #{tpu_custom_call.1} parent=11 // pred_region
          _
        $region32: #{tpu_custom_call.1} parent=11 // pred_fallthru
          _
        // Predicated region
        $region33: #{tpu_custom_call.1} parent=11 // pred_check
          %p278 = pneg %p174
        $region34: #{tpu_custom_call.1} parent=11 // pred_check_branch
          %280 = sbr.rel (%p278) target = $region36
        $region35: #{tpu_custom_call.1} parent=11 // pred_region
          _
        $region36: #{tpu_custom_call.1} parent=11 // pred_fallthru
          _
        // Predicated region
        $region37: #{tpu_custom_call.1} parent=11 // pred_check
          %p281 = pneg %p195
        $region38: #{tpu_custom_call.1} parent=11 // pred_check_branch
          %283 = sbr.rel (%p281) target = $region40
        $region39: #{tpu_custom_call.1} parent=11 // pred_region
          _
        $region40: #{tpu_custom_call.1} parent=11 // pred_fallthru
          _
        // Predicated region
        $region41: #{tpu_custom_call.1} parent=11 // pred_check
          %p284 = pneg %p216
        $region42: #{tpu_custom_call.1} parent=11 // pred_check_branch
          %286 = sbr.rel (%p284) target = $region44
        $region43: #{tpu_custom_call.1} parent=11 // pred_region
          _
        $region44: #{tpu_custom_call.1} parent=11 // pred_fallthru
          _
      $region12: #{tpu_custom_call.1} parent=5 // pred_fallthru
        _
      %p287 = scmp.lt.s32.totalorder %s22, 4
      // Predicated region
      $region45: #{tpu_custom_call.1} parent=5 // pred_check
        %p288 = pneg %p287
      $region46: #{tpu_custom_call.1} parent=5 // pred_check_branch
        %290 = sbr.rel (%p288) target = $region48
      $region47: #{tpu_custom_call.1} parent=5 // pred_region
        // Predicated region
        $region49: #{tpu_custom_call.1} parent=47 // pred_check
          %p291 = pneg %p42
        $region50: #{tpu_custom_call.1} parent=47 // pred_check_branch
          %293 = sbr.rel (%p291) target = $region52
        $region51: #{tpu_custom_call.1} parent=47 // pred_region
          %s294 = sand.u32 %s32, 1
          %s295 = scalar_lea.sflag [#allocation7], %s294
          %s296 = sand.u32 %s32, 1
          %s297 = smul.addr %s296, 128
          %s298 = scalar_lea.vmem [#allocation6], %s297
          %s299 = smul.u32 8, %s22
          %301 = vsyncadd %s295, 0
          %s302 = smul.addr %s299, 2
          %s303 = smul.addr %s302, 8
          %s304 = scalar_lea.hbm %s0, %s303
          %s305 = sshll.u32 %s304, 4
          %s306 = int_to_ptr.hbm [resolvable:$true] %s305
          %s307 = sshll.u32 %s298, 4
          %s308 = int_to_ptr.vmem [resolvable:$true] %s307
          %313 = dma.hbm_to_vmem [thread:$0]  %s306, 2048, %s308, %s295, 256, 256, 16
        $region52: #{tpu_custom_call.1} parent=47 // pred_fallthru
          _
      $region48: #{tpu_custom_call.1} parent=5 // pred_fallthru
        _
      %p314 = scmp.le.s32.totalorder 1, %s22
      %p315 = scmp.lt.s32.totalorder %s22, 5
      %p316 = pnand %p314, %p315
      %p317 = pneg %p316
      // Predicated region
      $region53: #{tpu_custom_call.1} parent=5 // pred_check
        _
      $region54: #{tpu_custom_call.1} parent=5 // pred_check_branch
        %319 = sbr.rel (%p316) target = $region56
      $region55: #{tpu_custom_call.1} parent=5 // pred_region
        %s320 = ssub.s32 %s22, 1
        %s321 = sand.u32 %s35, 1
        %s322 = scalar_lea.sflag [#allocation7], %s321
        %s323 = sand.u32 %s35, 1
        %s324 = smul.addr %s323, 128
        %s325 = scalar_lea.vmem [#allocation6], %s324
        // Predicated region
        $region57: #{tpu_custom_call.1} parent=55 // pred_check
          %p326 = pneg %p48
        $region58: #{tpu_custom_call.1} parent=55 // pred_check_branch
          %328 = sbr.rel (%p326) target = $region60
        $region59: #{tpu_custom_call.1} parent=55 // pred_region
          %330 = dma.done %s322, 2048
        $region60: #{tpu_custom_call.1} parent=55 // pred_fallthru
          _
        // Predicated region
        $region61: #{tpu_custom_call.1} parent=55 // pred_check
          %p331 = pneg %p111
        $region62: #{tpu_custom_call.1} parent=55 // pred_check_branch
          %333 = sbr.rel (%p331) target = $region64
        $region63: #{tpu_custom_call.1} parent=55 // pred_region
          %335 = dma.done [#allocation10], 4096
        $region64: #{tpu_custom_call.1} parent=55 // pred_fallthru
          _
        %s336 = sand.u32 %s35, 1
        %s337 = scalar_lea.sflag [#allocation7], %s336
        %s338 = sand.u32 %s35, 1
        %s339 = smul.addr %s338, 128
        %s340 = scalar_lea.vmem [#allocation6], %s339
        %p341 = pneg %p48
        %p342 = pneg %p45
        %p343 = pneg %p69
        %p344 = pneg %p66
        %p345 = pneg %p90
        %p346 = pneg %p87
        %p347 = pneg %p111
        %p348 = pneg %p108
        %p349 = pneg %p132
        %p350 = pneg %p129
        %p351 = pneg %p153
        %p352 = pneg %p150
        %p353 = pneg %p174
        %p354 = pneg %p171
        %p355 = pneg %p195
        %p356 = pneg %p192
        %p357 = pneg %p216
        %p358 = pneg %p213
        %p359 = pneg %p237
        %p360 = pneg %p234
        %s361 = smul.u32 8, %s27
        %p362 = scmp.eq.s32.totalorder %s27, 0
        // Predicated region
        $region65: #{tpu_custom_call.1} parent=55 // pred_check
          %p363 = pneg %p362
        $region66: #{tpu_custom_call.1} parent=55 // pred_check_branch
          %365 = sbr.rel (%p363) target = $region68
        $region67: #{tpu_custom_call.1} parent=55 // pred_region
          %vm366 = vcmask 0
          %367 = vst.msk [vmem:[#allocation2] sm:$0x1] %vm366, -inf
          %368 = vst.msk [vmem:[#allocation3] sm:$0x1] %vm366, 0.0
          %369 = vst [vmem:[#allocation4] sm:$0x1] 0.0
        $region68: #{tpu_custom_call.1} parent=55 // pred_fallthru
          _
        %v370 = vld [vmem:[%s325] sm:$0xff]
        %v371 = vld [vmem:[%s325 + $0x8] sm:$0xff]
        %v372 = vld [vmem:[%s325 + $0x10] sm:$0xff]
        %v373 = vld [vmem:[%s325 + $0x18] sm:$0xff]
        %v374 = vld [vmem:[%s325 + $0x20] sm:$0xff]
        %v375 = vld [vmem:[%s325 + $0x28] sm:$0xff]
        %v376 = vld [vmem:[%s325 + $0x30] sm:$0xff]
        %v377 = vld [vmem:[%s325 + $0x38] sm:$0xff]
        %v378 = vld [vmem:[%s325 + $0x40] sm:$0xff]
        %v379 = vld [vmem:[%s325 + $0x48] sm:$0xff]
        %v380 = vld [vmem:[%s325 + $0x50] sm:$0xff]
        %v381 = vld [vmem:[%s325 + $0x58] sm:$0xff]
        %v382 = vld [vmem:[%s325 + $0x60] sm:$0xff]
        %v383 = vld [vmem:[%s325 + $0x68] sm:$0xff]
        %v384 = vld [vmem:[%s325 + $0x70] sm:$0xff]
        %v385 = vld [vmem:[%s325 + $0x78] sm:$0xff]
        %v386 = vld [vmem:[%s1] sm:$0xff]
        %v387 = vld [vmem:[%s1 + $0x8] sm:$0xff]
        %v388 = vld [vmem:[%s1 + $0x10] sm:$0xff]
        %v389 = vld [vmem:[%s1 + $0x18] sm:$0xff]
        %v390 = vld [vmem:[%s1 + $0x20] sm:$0xff]
        %v391 = vld [vmem:[%s1 + $0x28] sm:$0xff]
        %v392 = vld [vmem:[%s1 + $0x30] sm:$0xff]
        %v393 = vld [vmem:[%s1 + $0x38] sm:$0xff]
        %v394 = vld [vmem:[%s1 + $0x40] sm:$0xff]
        %v395 = vld [vmem:[%s1 + $0x48] sm:$0xff]
        %v396 = vld [vmem:[%s1 + $0x50] sm:$0xff]
        %v397 = vld [vmem:[%s1 + $0x58] sm:$0xff]
        %v398 = vld [vmem:[%s1 + $0x60] sm:$0xff]
        %v399 = vld [vmem:[%s1 + $0x68] sm:$0xff]
        %v400 = vld [vmem:[%s1 + $0x70] sm:$0xff]
        %v401 = vld [vmem:[%s1 + $0x78] sm:$0xff]
        %v402 = vld [vmem:[%s1 + $0x80] sm:$0xff]
        %v403 = vld [vmem:[%s1 + $0x88] sm:$0xff]
        %v404 = vld [vmem:[%s1 + $0x90] sm:$0xff]
        %v405 = vld [vmem:[%s1 + $0x98] sm:$0xff]
        %v406 = vld [vmem:[%s1 + $0xa0] sm:$0xff]
        %v407 = vld [vmem:[%s1 + $0xa8] sm:$0xff]
        %v408 = vld [vmem:[%s1 + $0xb0] sm:$0xff]
        %v409 = vld [vmem:[%s1 + $0xb8] sm:$0xff]
        %v410 = vld [vmem:[%s1 + $0xc0] sm:$0xff]
        %v411 = vld [vmem:[%s1 + $0xc8] sm:$0xff]
        %v412 = vld [vmem:[%s1 + $0xd0] sm:$0xff]
        %v413 = vld [vmem:[%s1 + $0xd8] sm:$0xff]
        %v414 = vld [vmem:[%s1 + $0xe0] sm:$0xff]
        %v415 = vld [vmem:[%s1 + $0xe8] sm:$0xff]
        %v416 = vld [vmem:[%s1 + $0xf0] sm:$0xff]
        %v417 = vld [vmem:[%s1 + $0xf8] sm:$0xff]
        %v418 = vld [vmem:[%s2] sm:$0x1]
        %v420 = vperm.slane %v418, 0
        %422 = vmatpush.msra.mxu0 %v401
        %423 = vmatpush.msra.mxu0 %v400
        %424 = vmatpush.msra.mxu0 %v399
        %425 = vmatpush.msra.mxu0 %v398
        %426 = vmatpush.msra.mxu0 %v397
        %427 = vmatpush.msra.mxu0 %v396
        %428 = vmatpush.msra.mxu0 %v395
        %429 = vmatpush.msra.mxu0 %v394
        %430 = vmatpush.msra.mxu0 %v393
        %431 = vmatpush.msra.mxu0 %v392
        %432 = vmatpush.msra.mxu0 %v391
        %433 = vmatpush.msra.mxu0 %v390
        %434 = vmatpush.msra.mxu0 %v389
        %435 = vmatpush.msra.mxu0 %v388
        %436 = vmatpush.msra.mxu0 %v387
        %437 = vmatpush.msra.mxu0 %v386
        %438 = vmatmul.f32.gmra.mxu0 %v370
        %v439 = vpop.f32.mrf.mxu0
        %v440 = vadd.f32 %v420, %v439
        %441 = vmatmul.f32.gmra.mxu0 %v372
        %v442 = vpop.f32.mrf.mxu0
        %v443 = vadd.f32 %v420, %v442
        %444 = vmatmul.f32.gmra.mxu0 %v374
        %v445 = vpop.f32.mrf.mxu0
        %v446 = vadd.f32 %v420, %v445
        %447 = vmatmul.f32.gmra.mxu0 %v376
        %v448 = vpop.f32.mrf.mxu0
        %v449 = vadd.f32 %v420, %v448
        %450 = vmatmul.f32.gmra.mxu0 %v378
        %v451 = vpop.f32.mrf.mxu0
        %v452 = vadd.f32 %v420, %v451
        %453 = vmatmul.f32.gmra.mxu0 %v380
        %v454 = vpop.f32.mrf.mxu0
        %v455 = vadd.f32 %v420, %v454
        %456 = vmatmul.f32.gmra.mxu0 %v382
        %v457 = vpop.f32.mrf.mxu0
        %v458 = vadd.f32 %v420, %v457
        %459 = vmatmul.f32.gmra.mxu0 %v384
        %v460 = vpop.f32.mrf.mxu0
        %v461 = vadd.f32 %v420, %v460
        %462 = vdwg.mxu0
        %463 = vmatpush.msra.mxu0 %v417
        %464 = vmatpush.msra.mxu0 %v416
        %465 = vmatpush.msra.mxu0 %v415
        %466 = vmatpush.msra.mxu0 %v414
        %467 = vmatpush.msra.mxu0 %v413
        %468 = vmatpush.msra.mxu0 %v412
        %469 = vmatpush.msra.mxu0 %v411
        %470 = vmatpush.msra.mxu0 %v410
        %471 = vmatpush.msra.mxu0 %v409
        %472 = vmatpush.msra.mxu0 %v408
        %473 = vmatpush.msra.mxu0 %v407
        %474 = vmatpush.msra.mxu0 %v406
        %475 = vmatpush.msra.mxu0 %v405
        %476 = vmatpush.msra.mxu0 %v404
        %477 = vmatpush.msra.mxu0 %v403
        %478 = vmatpush.msra.mxu0 %v402
        %479 = vmatmul.f32.gmra.mxu0 %v371
        %v480 = vpop.f32.mrf.mxu0
        %v481 = vadd.f32 %v440, %v480
        %482 = vmatmul.f32.gmra.mxu0 %v373
        %v483 = vpop.f32.mrf.mxu0
        %v484 = vadd.f32 %v443, %v483
        %485 = vmatmul.f32.gmra.mxu0 %v375
        %v486 = vpop.f32.mrf.mxu0
        %v487 = vadd.f32 %v446, %v486
        %488 = vmatmul.f32.gmra.mxu0 %v377
        %v489 = vpop.f32.mrf.mxu0
        %v490 = vadd.f32 %v449, %v489
        %491 = vmatmul.f32.gmra.mxu0 %v379
        %v492 = vpop.f32.mrf.mxu0
        %v493 = vadd.f32 %v452, %v492
        %494 = vmatmul.f32.gmra.mxu0 %v381
        %v495 = vpop.f32.mrf.mxu0
        %v496 = vadd.f32 %v455, %v495
        %497 = vmatmul.f32.gmra.mxu0 %v383
        %v498 = vpop.f32.mrf.mxu0
        %v499 = vadd.f32 %v458, %v498
        %500 = vmatmul.f32.gmra.mxu0 %v385
        %v501 = vpop.f32.mrf.mxu0
        %v502 = vadd.f32 %v461, %v501
        %503 = vdwg.mxu0
        %v504 = vmax.f32 %v481, 0.0
        %v505 = vmax.f32 %v484, 0.0
        %v506 = vmax.f32 %v487, 0.0
        %v507 = vmax.f32 %v490, 0.0
        %v508 = vmax.f32 %v493, 0.0
        %v509 = vmax.f32 %v496, 0.0
        %v510 = vmax.f32 %v499, 0.0
        %v511 = vmax.f32 %v502, 0.0
        %v512 = vld [vmem:[#allocation9] sm:$0xff]
        %v513 = vld [vmem:[#allocation9 + $0x8] sm:$0xff]
        %v514 = vld [vmem:[#allocation9 + $0x10] sm:$0xff]
        %v515 = vld [vmem:[#allocation9 + $0x18] sm:$0xff]
        %v516 = vld [vmem:[#allocation9 + $0x20] sm:$0xff]
        %v517 = vld [vmem:[#allocation9 + $0x28] sm:$0xff]
        %v518 = vld [vmem:[#allocation9 + $0x30] sm:$0xff]
        %v519 = vld [vmem:[#allocation9 + $0x38] sm:$0xff]
        %v520 = vld [vmem:[#allocation9 + $0x40] sm:$0xff]
        %v521 = vld [vmem:[#allocation9 + $0x48] sm:$0xff]
        %v522 = vld [vmem:[#allocation9 + $0x50] sm:$0xff]
        %v523 = vld [vmem:[#allocation9 + $0x58] sm:$0xff]
        %v524 = vld [vmem:[#allocation9 + $0x60] sm:$0xff]
        %v525 = vld [vmem:[#allocation9 + $0x68] sm:$0xff]
        %v526 = vld [vmem:[#allocation9 + $0x70] sm:$0xff]
        %v527 = vld [vmem:[#allocation9 + $0x78] sm:$0xff]
        %v528 = vld [vmem:[#allocation9 + $0x80] sm:$0xff]
        %v529 = vld [vmem:[#allocation9 + $0x88] sm:$0xff]
        %v530 = vld [vmem:[#allocation9 + $0x90] sm:$0xff]
        %v531 = vld [vmem:[#allocation9 + $0x98] sm:$0xff]
        %v532 = vld [vmem:[#allocation9 + $0xa0] sm:$0xff]
        %v533 = vld [vmem:[#allocation9 + $0xa8] sm:$0xff]
        %v534 = vld [vmem:[#allocation9 + $0xb0] sm:$0xff]
        %v535 = vld [vmem:[#allocation9 + $0xb8] sm:$0xff]
        %v536 = vld [vmem:[#allocation9 + $0xc0] sm:$0xff]
        %v537 = vld [vmem:[#allocation9 + $0xc8] sm:$0xff]
        %v538 = vld [vmem:[#allocation9 + $0xd0] sm:$0xff]
        %v539 = vld [vmem:[#allocation9 + $0xd8] sm:$0xff]
        %v540 = vld [vmem:[#allocation9 + $0xe0] sm:$0xff]
        %v541 = vld [vmem:[#allocation9 + $0xe8] sm:$0xff]
        %v542 = vld [vmem:[#allocation9 + $0xf0] sm:$0xff]
        %v543 = vld [vmem:[#allocation9 + $0xf8] sm:$0xff]
        %v544 = vld [vmem:[%s4] sm:$0x3]
        %v546 = vperm.slane %v544, 0
        %v547 = vperm.slane %v544, 1
        %550 = vmatpush.msra.mxu0 %v542
        %551 = vmatpush.msra.mxu0 %v540
        %552 = vmatpush.msra.mxu0 %v538
        %553 = vmatpush.msra.mxu0 %v536
        %554 = vmatpush.msra.mxu0 %v534
        %555 = vmatpush.msra.mxu0 %v532
        %556 = vmatpush.msra.mxu0 %v530
        %557 = vmatpush.msra.mxu0 %v528
        %558 = vmatpush.msra.mxu0 %v526
        %559 = vmatpush.msra.mxu0 %v524
        %560 = vmatpush.msra.mxu0 %v522
        %561 = vmatpush.msra.mxu0 %v520
        %562 = vmatpush.msra.mxu0 %v518
        %563 = vmatpush.msra.mxu0 %v516
        %564 = vmatpush.msra.mxu0 %v514
        %565 = vmatpush.msra.mxu0 %v512
        %566 = vmatmul.f32.gmra.mxu0 %v504
        %v567 = vpop.f32.mrf.mxu0
        %v568 = vadd.f32 %v546, %v567
        %569 = vmatmul.f32.gmra.mxu0 %v505
        %v570 = vpop.f32.mrf.mxu0
        %v571 = vadd.f32 %v546, %v570
        %572 = vmatmul.f32.gmra.mxu0 %v506
        %v573 = vpop.f32.mrf.mxu0
        %v574 = vadd.f32 %v546, %v573
        %575 = vmatmul.f32.gmra.mxu0 %v507
        %v576 = vpop.f32.mrf.mxu0
        %v577 = vadd.f32 %v546, %v576
        %578 = vmatmul.f32.gmra.mxu0 %v508
        %v579 = vpop.f32.mrf.mxu0
        %v580 = vadd.f32 %v546, %v579
        %581 = vmatmul.f32.gmra.mxu0 %v509
        %v582 = vpop.f32.mrf.mxu0
        %v583 = vadd.f32 %v546, %v582
        %584 = vmatmul.f32.gmra.mxu0 %v510
        %v585 = vpop.f32.mrf.mxu0
        %v586 = vadd.f32 %v546, %v585
        %587 = vmatmul.f32.gmra.mxu0 %v511
        %v588 = vpop.f32.mrf.mxu0
        %v589 = vadd.f32 %v546, %v588
        %590 = vdwg.mxu0
        %591 = vmatpush.msra.mxu0 %v543
        %592 = vmatpush.msra.mxu0 %v541
        %593 = vmatpush.msra.mxu0 %v539
        %594 = vmatpush.msra.mxu0 %v537
        %595 = vmatpush.msra.mxu0 %v535
        %596 = vmatpush.msra.mxu0 %v533
        %597 = vmatpush.msra.mxu0 %v531
        %598 = vmatpush.msra.mxu0 %v529
        %599 = vmatpush.msra.mxu0 %v527
        %600 = vmatpush.msra.mxu0 %v525
        %601 = vmatpush.msra.mxu0 %v523
        %602 = vmatpush.msra.mxu0 %v521
        %603 = vmatpush.msra.mxu0 %v519
        %604 = vmatpush.msra.mxu0 %v517
        %605 = vmatpush.msra.mxu0 %v515
        %606 = vmatpush.msra.mxu0 %v513
        %607 = vmatmul.f32.gmra.mxu0 %v504
        %v608 = vpop.f32.mrf.mxu0
        %v609 = vadd.f32 %v547, %v608
        %610 = vmatmul.f32.gmra.mxu0 %v505
        %v611 = vpop.f32.mrf.mxu0
        %v612 = vadd.f32 %v547, %v611
        %613 = vmatmul.f32.gmra.mxu0 %v506
        %v614 = vpop.f32.mrf.mxu0
        %v615 = vadd.f32 %v547, %v614
        %616 = vmatmul.f32.gmra.mxu0 %v507
        %v617 = vpop.f32.mrf.mxu0
        %v618 = vadd.f32 %v547, %v617
        %619 = vmatmul.f32.gmra.mxu0 %v508
        %v620 = vpop.f32.mrf.mxu0
        %v621 = vadd.f32 %v547, %v620
        %622 = vmatmul.f32.gmra.mxu0 %v509
        %v623 = vpop.f32.mrf.mxu0
        %v624 = vadd.f32 %v547, %v623
        %625 = vmatmul.f32.gmra.mxu0 %v510
        %v626 = vpop.f32.mrf.mxu0
        %v627 = vadd.f32 %v547, %v626
        %628 = vmatmul.f32.gmra.mxu0 %v511
        %v629 = vpop.f32.mrf.mxu0
        %v630 = vadd.f32 %v547, %v629
        %631 = vdwg.mxu0
        %v632 = vtanh.pop %v568
        %v633 = vtanh.pop %v571
        %v634 = vtanh.pop %v574
        %v635 = vtanh.pop %v577
        %v636 = vtanh.pop %v580
        %v637 = vtanh.pop %v583
        %v638 = vtanh.pop %v586
        %v639 = vtanh.pop %v589
        %v640 = vxor.u32 %v609, 2147483648
        %v641 = vxor.u32 %v612, 2147483648
        %v642 = vxor.u32 %v615, 2147483648
        %v643 = vxor.u32 %v618, 2147483648
        %v644 = vxor.u32 %v621, 2147483648
        %v645 = vxor.u32 %v624, 2147483648
        %v646 = vxor.u32 %v627, 2147483648
        %v647 = vxor.u32 %v630, 2147483648
        %v648 = vmul.f32 %v640, 1.442695
        %v649 = vpow.pop %v648
        %v650 = vmul.f32 %v641, 1.442695
        %v651 = vpow.pop %v650
        %v652 = vmul.f32 %v642, 1.442695
        %v653 = vpow.pop %v652
        %v654 = vmul.f32 %v643, 1.442695
        %v655 = vpow.pop %v654
        %v656 = vmul.f32 %v644, 1.442695
        %v657 = vpow.pop %v656
        %v658 = vmul.f32 %v645, 1.442695
        %v659 = vpow.pop %v658
        %v660 = vmul.f32 %v646, 1.442695
        %v661 = vpow.pop %v660
        %v662 = vmul.f32 %v647, 1.442695
        %v663 = vpow.pop %v662
        %v664 = vadd.f32 %v649, 1.0
        %v665 = vadd.f32 %v651, 1.0
        %v666 = vadd.f32 %v653, 1.0
        %v667 = vadd.f32 %v655, 1.0
        %v668 = vadd.f32 %v657, 1.0
        %v669 = vadd.f32 %v659, 1.0
        %v670 = vadd.f32 %v661, 1.0
        %v671 = vadd.f32 %v663, 1.0
        %v672 = vrcp.pop %v664
        %v673 = vmul.f32 %v664, %v672
        %v674 = vsub.f32 1.0, %v673
        %v675 = vmul.f32 %v672, %v674
        %v676 = vadd.f32 %v672, %v675
        %vm677 = vweird.f32 %v664
        %vm678 = vweird.f32 %v672
        %vm679 = vmor %vm677, %vm678
        %v680 = vsel %vm679, %v672, %v676
        %v681 = vand.u32 2147483647, %v664
        %vm682 = vcmp.eq.f32.partialorder %v681, 8.507059e+37
        %v683 = vand.u32 %v664, 2147483648
        %v684 = vor.u32 1.1754944e-38, %v683
        %v685 = vsel %vm682, %v684, %v680
        %v686 = vmul.f32 1.0, %v685
        %v687 = vrcp.pop %v665
        %v688 = vmul.f32 %v665, %v687
        %v689 = vsub.f32 1.0, %v688
        %v690 = vmul.f32 %v687, %v689
        %v691 = vadd.f32 %v687, %v690
        %vm692 = vweird.f32 %v665
        %vm693 = vweird.f32 %v687
        %vm694 = vmor %vm692, %vm693
        %v695 = vsel %vm694, %v687, %v691
        %v696 = vand.u32 2147483647, %v665
        %vm697 = vcmp.eq.f32.partialorder %v696, 8.507059e+37
        %v698 = vand.u32 %v665, 2147483648
        %v699 = vor.u32 1.1754944e-38, %v698
        %v700 = vsel %vm697, %v699, %v695
        %v701 = vmul.f32 1.0, %v700
        %v702 = vrcp.pop %v666
        %v703 = vmul.f32 %v666, %v702
        %v704 = vsub.f32 1.0, %v703
        %v705 = vmul.f32 %v702, %v704
        %v706 = vadd.f32 %v702, %v705
        %vm707 = vweird.f32 %v666
        %vm708 = vweird.f32 %v702
        %vm709 = vmor %vm707, %vm708
        %v710 = vsel %vm709, %v702, %v706
        %v711 = vand.u32 2147483647, %v666
        %vm712 = vcmp.eq.f32.partialorder %v711, 8.507059e+37
        %v713 = vand.u32 %v666, 2147483648
        %v714 = vor.u32 1.1754944e-38, %v713
        %v715 = vsel %vm712, %v714, %v710
        %v716 = vmul.f32 1.0, %v715
        %v717 = vrcp.pop %v667
        %v718 = vmul.f32 %v667, %v717
        %v719 = vsub.f32 1.0, %v718
        %v720 = vmul.f32 %v717, %v719
        %v721 = vadd.f32 %v717, %v720
        %vm722 = vweird.f32 %v667
        %vm723 = vweird.f32 %v717
        %vm724 = vmor %vm722, %vm723
        %v725 = vsel %vm724, %v717, %v721
        %v726 = vand.u32 2147483647, %v667
        %vm727 = vcmp.eq.f32.partialorder %v726, 8.507059e+37
        %v728 = vand.u32 %v667, 2147483648
        %v729 = vor.u32 1.1754944e-38, %v728
        %v730 = vsel %vm727, %v729, %v725
        %v731 = vmul.f32 1.0, %v730
        %v732 = vrcp.pop %v668
        %v733 = vmul.f32 %v668, %v732
        %v734 = vsub.f32 1.0, %v733
        %v735 = vmul.f32 %v732, %v734
        %v736 = vadd.f32 %v732, %v735
        %vm737 = vweird.f32 %v668
        %vm738 = vweird.f32 %v732
        %vm739 = vmor %vm737, %vm738
        %v740 = vsel %vm739, %v732, %v736
        %v741 = vand.u32 2147483647, %v668
        %vm742 = vcmp.eq.f32.partialorder %v741, 8.507059e+37
        %v743 = vand.u32 %v668, 2147483648
        %v744 = vor.u32 1.1754944e-38, %v743
        %v745 = vsel %vm742, %v744, %v740
        %v746 = vmul.f32 1.0, %v745
        %v747 = vrcp.pop %v669
        %v748 = vmul.f32 %v669, %v747
        %v749 = vsub.f32 1.0, %v748
        %v750 = vmul.f32 %v747, %v749
        %v751 = vadd.f32 %v747, %v750
        %vm752 = vweird.f32 %v669
        %vm753 = vweird.f32 %v747
        %vm754 = vmor %vm752, %vm753
        %v755 = vsel %vm754, %v747, %v751
        %v756 = vand.u32 2147483647, %v669
        %vm757 = vcmp.eq.f32.partialorder %v756, 8.507059e+37
        %v758 = vand.u32 %v669, 2147483648
        %v759 = vor.u32 1.1754944e-38, %v758
        %v760 = vsel %vm757, %v759, %v755
        %v761 = vmul.f32 1.0, %v760
        %v762 = vrcp.pop %v670
        %v763 = vmul.f32 %v670, %v762
        %v764 = vsub.f32 1.0, %v763
        %v765 = vmul.f32 %v762, %v764
        %v766 = vadd.f32 %v762, %v765
        %vm767 = vweird.f32 %v670
        %vm768 = vweird.f32 %v762
        %vm769 = vmor %vm767, %vm768
        %v770 = vsel %vm769, %v762, %v766
        %v771 = vand.u32 2147483647, %v670
        %vm772 = vcmp.eq.f32.partialorder %v771, 8.507059e+37
        %v773 = vand.u32 %v670, 2147483648
        %v774 = vor.u32 1.1754944e-38, %v773
        %v775 = vsel %vm772, %v774, %v770
        %v776 = vmul.f32 1.0, %v775
        %v777 = vrcp.pop %v671
        %v778 = vmul.f32 %v671, %v777
        %v779 = vsub.f32 1.0, %v778
        %v780 = vmul.f32 %v777, %v779
        %v781 = vadd.f32 %v777, %v780
        %vm782 = vweird.f32 %v671
        %vm783 = vweird.f32 %v777
        %vm784 = vmor %vm782, %vm783
        %v785 = vsel %vm784, %v777, %v781
        %v786 = vand.u32 2147483647, %v671
        %vm787 = vcmp.eq.f32.partialorder %v786, 8.507059e+37
        %v788 = vand.u32 %v671, 2147483648
        %v789 = vor.u32 1.1754944e-38, %v788
        %v790 = vsel %vm787, %v789, %v785
        %v791 = vmul.f32 1.0, %v790
        %v792 = vmul.f32 %v632, %v686
        %v793 = vmul.f32 %v633, %v701
        %v794 = vmul.f32 %v634, %v716
        %v795 = vmul.f32 %v635, %v731
        %v796 = vmul.f32 %v636, %v746
        %v797 = vmul.f32 %v637, %v761
        %v798 = vmul.f32 %v638, %v776
        %v799 = vmul.f32 %v639, %v791
        %v800 = vld [vmem:[%s5] sm:$0xff]
        %v801 = vld [vmem:[%s5 + $0x8] sm:$0xff]
        %v802 = vld [vmem:[%s5 + $0x10] sm:$0xff]
        %v803 = vld [vmem:[%s5 + $0x18] sm:$0xff]
        %v804 = vld [vmem:[%s5 + $0x20] sm:$0xff]
        %v805 = vld [vmem:[%s5 + $0x28] sm:$0xff]
        %v806 = vld [vmem:[%s5 + $0x30] sm:$0xff]
        %v807 = vld [vmem:[%s5 + $0x38] sm:$0xff]
        %v808 = vld [vmem:[%s5 + $0x40] sm:$0xff]
        %v809 = vld [vmem:[%s5 + $0x48] sm:$0xff]
        %v810 = vld [vmem:[%s5 + $0x50] sm:$0xff]
        %v811 = vld [vmem:[%s5 + $0x58] sm:$0xff]
        %v812 = vld [vmem:[%s5 + $0x60] sm:$0xff]
        %v813 = vld [vmem:[%s5 + $0x68] sm:$0xff]
        %v814 = vld [vmem:[%s5 + $0x70] sm:$0xff]
        %v815 = vld [vmem:[%s5 + $0x78] sm:$0xff]
        %v816 = vld [vmem:[#allocation5] sm:$0x1]
        %v818 = vperm.slane %v816, 0
        %820 = vmatpush.msra.mxu0 %v815
        %821 = vmatpush.msra.mxu0 %v814
        %822 = vmatpush.msra.mxu0 %v813
        %823 = vmatpush.msra.mxu0 %v812
        %824 = vmatpush.msra.mxu0 %v811
        %825 = vmatpush.msra.mxu0 %v810
        %826 = vmatpush.msra.mxu0 %v809
        %827 = vmatpush.msra.mxu0 %v808
        %828 = vmatpush.msra.mxu0 %v807
        %829 = vmatpush.msra.mxu0 %v806
        %830 = vmatpush.msra.mxu0 %v805
        %831 = vmatpush.msra.mxu0 %v804
        %832 = vmatpush.msra.mxu0 %v803
        %833 = vmatpush.msra.mxu0 %v802
        %834 = vmatpush.msra.mxu0 %v801
        %835 = vmatpush.msra.mxu0 %v800
        %836 = vmatmul.f32.gmra.mxu0 %v792
        %v837 = vpop.f32.mrf.mxu0
        %v838 = vadd.f32 %v818, %v837
        %839 = vmatmul.f32.gmra.mxu0 %v793
        %v840 = vpop.f32.mrf.mxu0
        %v841 = vadd.f32 %v818, %v840
        %842 = vmatmul.f32.gmra.mxu0 %v794
        %v843 = vpop.f32.mrf.mxu0
        %v844 = vadd.f32 %v818, %v843
        %845 = vmatmul.f32.gmra.mxu0 %v795
        %v846 = vpop.f32.mrf.mxu0
        %v847 = vadd.f32 %v818, %v846
        %848 = vmatmul.f32.gmra.mxu0 %v796
        %v849 = vpop.f32.mrf.mxu0
        %v850 = vadd.f32 %v818, %v849
        %851 = vmatmul.f32.gmra.mxu0 %v797
        %v852 = vpop.f32.mrf.mxu0
        %v853 = vadd.f32 %v818, %v852
        %854 = vmatmul.f32.gmra.mxu0 %v798
        %v855 = vpop.f32.mrf.mxu0
        %v856 = vadd.f32 %v818, %v855
        %857 = vmatmul.f32.gmra.mxu0 %v799
        %v858 = vpop.f32.mrf.mxu0
        %v859 = vadd.f32 %v818, %v858
        %860 = vdwg.mxu0
        %v861 = vlaneseq
        %v862 = vshrl.u32 %v861, 7
        %v863 = vadd.s32 %v862, 8
        %v864 = vadd.s32 %v862, 16
        %v865 = vadd.s32 %v862, 24
        %v866 = vadd.s32 %v862, 32
        %v867 = vadd.s32 %v862, 40
        %v868 = vadd.s32 %v862, 48
        %v869 = vadd.s32 %v862, 56
        %s870 = smul.u32 %s27, 64
        %v871 = vstv %s870
        %v872 = vadd.s32 %v862, %v871
        %v873 = vadd.s32 %v863, %v871
        %v874 = vadd.s32 %v864, %v871
        %v875 = vadd.s32 %v865, %v871
        %v876 = vadd.s32 %v866, %v871
        %v877 = vadd.s32 %v867, %v871
        %v878 = vadd.s32 %v868, %v871
        %v879 = vadd.s32 %v869, %v871
        %vm880 = vcmp.lt.s32.totalorder %v872, 200
        %vm881 = vcmp.lt.s32.totalorder %v873, 200
        %vm882 = vcmp.lt.s32.totalorder %v874, 200
        %vm883 = vcmp.lt.s32.totalorder %v875, 200
        %vm884 = vcmp.lt.s32.totalorder %v876, 200
        %vm885 = vcmp.lt.s32.totalorder %v877, 200
        %vm886 = vcmp.lt.s32.totalorder %v878, 200
        %vm887 = vcmp.lt.s32.totalorder %v879, 200
        %v888 = vsel %vm880, %v838, -inf
        %v889 = vsel %vm881, %v841, -inf
        %v890 = vsel %vm882, %v844, -inf
        %v891 = vsel %vm883, %v847, -inf
        %v892 = vsel %vm884, %v850, -inf
        %v893 = vsel %vm885, %v853, -inf
        %v894 = vsel %vm886, %v856, -inf
        %v895 = vsel %vm887, %v859, -inf
        %v896 = vld [vmem:[#allocation2] sm:$0x1]
        %vm897 = vcmask 7168
        %v898 = vsel %vm897, %v888, -inf
        %v899 = vsel %vm897, %v889, -inf
        %v900 = vsel %vm897, %v890, -inf
        %v901 = vsel %vm897, %v891, -inf
        %v902 = vsel %vm897, %v892, -inf
        %v903 = vmax.f32 %v898, %v902
        %v904 = vsel %vm897, %v893, -inf
        %v905 = vmax.f32 %v899, %v904
        %v906 = vsel %vm897, %v894, -inf
        %v907 = vmax.f32 %v900, %v906
        %v908 = vsel %vm897, %v895, -inf
        %v909 = vmax.f32 %v901, %v908
        %v910 = vmax.f32 %v903, %v905
        %v911 = vmax.f32 %v907, %v909
        %v912 = vmax.f32 %v910, %v911
        %v913 = vrot.slane %v912, 4
        %v914 = vmax.f32 %v912, %v913
        %v915 = vrot.slane %v914, 2
        %v916 = vmax.f32 %v914, %v915
        %v917 = vrot.slane %v916, 1
        %v918 = vmax.f32 %v916, %v917
        %v919 = vmax.f32 %v896, %v918
        %v920 = vsub.f32 %v896, %v919
        %v921 = vmul.f32 %v920, 1.442695
        %v922 = vpow.pop %v921
        %v924 = vperm.slane %v919, 0
        %v926 = vsub.f32 %v888, %v924
        %v927 = vsub.f32 %v889, %v924
        %v928 = vsub.f32 %v890, %v924
        %v929 = vsub.f32 %v891, %v924
        %v930 = vsub.f32 %v892, %v924
        %v931 = vsub.f32 %v893, %v924
        %v932 = vsub.f32 %v894, %v924
        %v933 = vsub.f32 %v895, %v924
        %v934 = vmul.f32 %v926, 1.442695
        %v935 = vpow.pop %v934
        %v936 = vmul.f32 %v927, 1.442695
        %v937 = vpow.pop %v936
        %v938 = vmul.f32 %v928, 1.442695
        %v939 = vpow.pop %v938
        %v940 = vmul.f32 %v929, 1.442695
        %v941 = vpow.pop %v940
        %v942 = vmul.f32 %v930, 1.442695
        %v943 = vpow.pop %v942
        %v944 = vmul.f32 %v931, 1.442695
        %v945 = vpow.pop %v944
        %v946 = vmul.f32 %v932, 1.442695
        %v947 = vpow.pop %v946
        %v948 = vmul.f32 %v933, 1.442695
        %v949 = vpow.pop %v948
        %v950 = vld [vmem:[#allocation3] sm:$0x1]
        %v951 = vmul.f32 %v922, %v950
        %v952 = vsel %vm897, %v935, 0.0
        %v953 = vsel %vm897, %v937, 0.0
        %v954 = vadd.f32 %v952, %v953
        %v955 = vsel %vm897, %v939, 0.0
        %v956 = vadd.f32 %v954, %v955
        %v957 = vsel %vm897, %v941, 0.0
        %v958 = vadd.f32 %v956, %v957
        %v959 = vsel %vm897, %v943, 0.0
        %v960 = vadd.f32 %v958, %v959
        %v961 = vsel %vm897, %v945, 0.0
        %v962 = vadd.f32 %v960, %v961
        %v963 = vsel %vm897, %v947, 0.0
        %v964 = vadd.f32 %v962, %v963
        %v965 = vsel %vm897, %v949, 0.0
        %v966 = vadd.f32 %v964, %v965
        %v967 = vrot.slane %v966, 4
        %v968 = vadd.f32 %v966, %v967
        %v969 = vrot.slane %v968, 2
        %v970 = vadd.f32 %v968, %v969
        %v971 = vrot.slane %v970, 1
        %v972 = vadd.f32 %v970, %v971
        %v973 = vadd.f32 %v951, %v972
        %vm974 = vcmask 0
        %975 = vst.msk [vmem:[#allocation3] sm:$0x1] %vm974, %v973
        %v976 = vld [vmem:[#allocation4] sm:$0x1]
        %978 = vset.pattern.permute.xlu0 0
        %979 = vperm.xlu0 %978, %v922
        %v980 = vpop.permute.xlu0 %979
        %v982 = vperm.slane %v980, 0
        %v983 = vmul.f32 %v982, %v976
        %985 = vset.pattern.permute.xlu0 0
        %986 = vperm.xlu0 %985, %v935
        %v987 = vpop.permute.xlu0 %986
        %990 = vset.pattern.permute.xlu0 0
        %991 = vperm.xlu0 %990, %v937
        %v992 = vpop.permute.xlu0 %991
        %995 = vset.pattern.permute.xlu0 0
        %996 = vperm.xlu0 %995, %v939
        %v997 = vpop.permute.xlu0 %996
        %1000 = vset.pattern.permute.xlu0 0
        %1001 = vperm.xlu0 %1000, %v941
        %v1002 = vpop.permute.xlu0 %1001
        %1005 = vset.pattern.permute.xlu0 0
        %1006 = vperm.xlu0 %1005, %v943
        %v1007 = vpop.permute.xlu0 %1006
        %1010 = vset.pattern.permute.xlu0 0
        %1011 = vperm.xlu0 %1010, %v945
        %v1012 = vpop.permute.xlu0 %1011
        %1015 = vset.pattern.permute.xlu0 0
        %1016 = vperm.xlu0 %1015, %v947
        %v1017 = vpop.permute.xlu0 %1016
        %1020 = vset.pattern.permute.xlu0 0
        %1021 = vperm.xlu0 %1020, %v949
        %v1022 = vpop.permute.xlu0 %1021
        %v1024 = vmul.f32 %v987, %v504
        %v1025 = vmul.f32 %v992, %v505
        %v1026 = vmul.f32 %v997, %v506
        %v1027 = vmul.f32 %v1002, %v507
        %v1028 = vmul.f32 %v1007, %v508
        %v1029 = vmul.f32 %v1012, %v509
        %v1030 = vmul.f32 %v1017, %v510
        %v1031 = vmul.f32 %v1022, %v511
        %v1032 = vadd.f32 %v1024, %v1025
        %v1033 = vadd.f32 %v1032, %v1026
        %v1034 = vadd.f32 %v1033, %v1027
        %v1035 = vadd.f32 %v1034, %v1028
        %v1036 = vadd.f32 %v1035, %v1029
        %v1037 = vadd.f32 %v1036, %v1030
        %v1038 = vadd.f32 %v1037, %v1031
        %v1039 = vrot.slane %v1038, 4
        %v1040 = vadd.f32 %v1038, %v1039
        %v1041 = vrot.slane %v1040, 2
        %v1042 = vadd.f32 %v1040, %v1041
        %v1043 = vrot.slane %v1042, 1
        %v1044 = vadd.f32 %v1042, %v1043
        %v1045 = vadd.f32 %v983, %v1044
        %1046 = vst [vmem:[#allocation4] sm:$0x1] %v1045
        %1047 = vst.msk [vmem:[#allocation2] sm:$0x1] %vm974, %v919
        %p1048 = scmp.eq.s32.totalorder %s27, 3
        // Predicated region
        $region69: #{tpu_custom_call.1} parent=55 // pred_check
          %p1049 = pneg %p1048
        $region70: #{tpu_custom_call.1} parent=55 // pred_check_branch
          %1051 = sbr.rel (%p1049) target = $region72
        $region71: #{tpu_custom_call.1} parent=55 // pred_region
          %v1052 = vld [vmem:[#allocation4] sm:$0x1]
          %v1053 = vld [vmem:[#allocation3] sm:$0x1]
          %1055 = vset.pattern.permute.xlu0 0
          %1056 = vperm.xlu0 %1055, %v1053
          %v1057 = vpop.permute.xlu0 %1056
          %v1059 = vperm.slane %v1057, 0
          %v1060 = vrcp.pop %v1059
          %v1061 = vmul.f32 %v1059, %v1060
          %v1062 = vsub.f32 1.0, %v1061
          %v1063 = vmul.f32 %v1060, %v1062
          %v1064 = vadd.f32 %v1060, %v1063
          %vm1065 = vweird.f32 %v1059
          %vm1066 = vweird.f32 %v1060
          %vm1067 = vmor %vm1065, %vm1066
          %v1068 = vsel %vm1067, %v1060, %v1064
          %v1069 = vand.u32 2147483647, %v1059
          %vm1070 = vcmp.eq.f32.partialorder %v1069, 8.507059e+37
          %v1071 = vand.u32 %v1059, 2147483648
          %v1072 = vor.u32 1.1754944e-38, %v1071
          %v1073 = vsel %vm1070, %v1072, %v1068
          %v1074 = vmul.f32 %v1052, %v1073
          %v1075 = vld [vmem:[%s7] sm:$0xff]
          %v1076 = vld [vmem:[%s7 + $0x8] sm:$0xff]
          %v1077 = vld [vmem:[%s7 + $0x10] sm:$0xff]
          %v1078 = vld [vmem:[%s7 + $0x18] sm:$0xff]
          %v1079 = vld [vmem:[%s7 + $0x20] sm:$0xff]
          %v1080 = vld [vmem:[%s7 + $0x28] sm:$0xff]
          %v1081 = vld [vmem:[%s7 + $0x30] sm:$0xff]
          %v1082 = vld [vmem:[%s7 + $0x38] sm:$0xff]
          %v1083 = vld [vmem:[%s7 + $0x40] sm:$0xff]
          %v1084 = vld [vmem:[%s7 + $0x48] sm:$0xff]
          %v1085 = vld [vmem:[%s7 + $0x50] sm:$0xff]
          %v1086 = vld [vmem:[%s7 + $0x58] sm:$0xff]
          %v1087 = vld [vmem:[%s7 + $0x60] sm:$0xff]
          %v1088 = vld [vmem:[%s7 + $0x68] sm:$0xff]
          %v1089 = vld [vmem:[%s7 + $0x70] sm:$0xff]
          %v1090 = vld [vmem:[%s7 + $0x78] sm:$0xff]
          %v1091 = vld [vmem:[%s8] sm:$0x1]
          %1092 = vmatpush.msra.mxu0 %v1090
          %1093 = vmatpush.msra.mxu0 %v1089
          %1094 = vmatpush.msra.mxu0 %v1088
          %1095 = vmatpush.msra.mxu0 %v1087
          %1096 = vmatpush.msra.mxu0 %v1086
          %1097 = vmatpush.msra.mxu0 %v1085
          %1098 = vmatpush.msra.mxu0 %v1084
          %1099 = vmatpush.msra.mxu0 %v1083
          %1100 = vmatpush.msra.mxu0 %v1082
          %1101 = vmatpush.msra.mxu0 %v1081
          %1102 = vmatpush.msra.mxu0 %v1080
          %1103 = vmatpush.msra.mxu0 %v1079
          %1104 = vmatpush.msra.mxu0 %v1078
          %1105 = vmatpush.msra.mxu0 %v1077
          %1106 = vmatpush.msra.mxu0 %v1076
          %1107 = vmatpush.msra.mxu0 %v1075
          %1108 = vmatmul.f32.gmra.mxu0 %v1074
          %v1109 = vpop.f32.mrf.mxu0
          %v1110 = vadd.f32 %v1091, %v1109
          %1111 = vdwg.mxu0
          %vm1112 = vcmask 73728
          %1113 = vst.msk [vmem:[#allocation11] sm:$0x1] %vm1112, %v1110
        $region72: #{tpu_custom_call.1} parent=55 // pred_fallthru
          _
        // Predicated region
        $region73: #{tpu_custom_call.1} parent=55 // pred_check
          %p1114 = pneg %p234
        $region74: #{tpu_custom_call.1} parent=55 // pred_check_branch
          %1116 = sbr.rel (%p1114) target = $region76
        $region75: #{tpu_custom_call.1} parent=55 // pred_region
          %1118 = vsyncadd [#allocation8], 0
          %s1120 = sshll.u32 [#allocation11], 4
          %s1121 = int_to_ptr.vmem [resolvable:$true] %s1120
          %s1122 = sshll.u32 %s9, 4
          %s1123 = int_to_ptr.hbm [resolvable:$true] %s1122
          %1125 = dma.vmem_to_hbm [thread:$0]  %s1121, 16, %s1123, [#allocation8]
        $region76: #{tpu_custom_call.1} parent=55 // pred_fallthru
          _
        // Predicated region
        $region77: #{tpu_custom_call.1} parent=55 // pred_check
          %p1126 = pneg %p234
        $region78: #{tpu_custom_call.1} parent=55 // pred_check_branch
          %1128 = sbr.rel (%p1126) target = $region80
        $region79: #{tpu_custom_call.1} parent=55 // pred_region
          %1130 = dma.done [#allocation8], 16
        $region80: #{tpu_custom_call.1} parent=55 // pred_fallthru
          _
      $region56: #{tpu_custom_call.1} parent=5 // pred_fallthru
        _
      %p1131 = scmp.le.s32.totalorder 2, %s22
      // Predicated region
      $region81: #{tpu_custom_call.1} parent=5 // pred_check
        %p1132 = pneg %p1131
      $region82: #{tpu_custom_call.1} parent=5 // pred_check_branch
        %1134 = sbr.rel (%p1132) target = $region84
      $region83: #{tpu_custom_call.1} parent=5 // pred_region
        %s1135 = ssub.s32 %s22, 2
      $region84: #{tpu_custom_call.1} parent=5 // pred_fallthru
        _
    $region6: #{tpu_custom_call.1} parent=1 // loop_footer
      %s26 = sadd.s32 1, %s22
    $region7: #{tpu_custom_call.1} parent=1 // loop_footer_branch
      %21 = sbr.rel target = $region3
    $region8: #{tpu_custom_call.1} parent=1 // loop_exit
      _
    %1136 = vsyncpa [#allocation7], 1
    %s1137 = scalar_lea.sflag [#allocation7], 1
    %1138 = vsyncpa %s1137, 1
    %1139 = vsyncpa [#allocation10], 1
    %1140 = vsyncpa [#allocation8], 1
    %s1141 = scalar_lea.sflag [#allocation8], 1
    %1142 = vsyncpa %s1141, 1

</llo_original>
